<compile_context>
chip_gen: v6e
topology: v6e:2x2x1
jax: 0.10.0
libtpu: 0.0.40
codegen_flags: <defaults>
</compile_context>

<pallas_src>
import functools

import jax
import jax.numpy as jnp
from jax import lax
from jax.experimental import pallas as pl
from jax.experimental.pallas import tpu as pltpu

EPS = 1e-5          # BatchNorm2d eps
NEG_SLOPE = 0.01    # LeakyReLU default negative_slope
KS = 3              # conv kernel size

# MXU operand dtype for the conv matmul; accumulation is f32 (preferred_element_type).
CONV_DTYPE = jnp.bfloat16


# ------------------------------ Pallas kernels ------------------------------

def bn_stats_kernel(x_ref, s_ref, sums_ref):
    """Per-batch-element BN batch statistics of z = x + style.

    x_ref:    (1, H, W, Cin)  NHWC block for one batch element
    s_ref:    (1, 1, Cin)     projected style for this batch element
    sums_ref: (1, 2, Cin)     [sum(z), sum(z^2)] over (H, W)
    """
    z = x_ref[...] + s_ref[...]                       # broadcast (1,1,Cin) over (1,H,W,Cin)
    # Leading-axis (VALU) partial sums first; single cross-sublane (XLU) reduce over W last.
    ps1 = jnp.sum(z, axis=(0, 1))                     # (W, Cin)
    ps2 = jnp.sum(z * z, axis=(0, 1))                 # (W, Cin)
    sums_ref[0, 0:1, :] = jnp.sum(ps1, axis=0, keepdims=True)
    sums_ref[0, 1:2, :] = jnp.sum(ps2, axis=0, keepdims=True)


def norm_conv_kernel(x_ref, scale_ref, shift_ref, wc_ref, bc_ref, o_ref,
                     a_ref, col_ref, *, transpose_out):
    """Fused style-add + BN affine + LeakyReLU + 3x3 'same' conv for one batch element.

    x_ref:     (1, H, W, Cin)        unpadded NHWC input block
    scale_ref: (1, 1, Cin)           gamma * rsqrt(var + eps)
    shift_ref: (1, 1, Cin)           (style_b - mean) * scale + beta   (style folded in)
    wc_ref:    (KS*KS*Cin, Cout)     conv weights in CONV_DTYPE, rows ordered (tap, Cin)
    bc_ref:    (1, Cout)             conv bias (f32)
    o_ref:     (1, Cout, H*W) if transpose_out else (1, H*W, Cout)
    a_ref:     VMEM (Hp, Wp, Cin)    zero-halo padded activation (CONV_DTYPE)
    col_ref:   VMEM (H*W, KS*KS*Cin) im2col staging buffer (CONV_DTYPE)
    """
    _, H, W, Cin = x_ref.shape
    pad = KS // 2
    Hp, Wp = H + 2 * pad, W + 2 * pad

    # Style + BN folded into a single per-channel affine (computed outside), then LeakyReLU.
    # Elementwise math in f32 (v5e-safe); cast to CONV_DTYPE only at the scratch store.
    y = x_ref[...] * scale_ref[...] + shift_ref[...]
    y = jnp.where(y >= 0.0, y, NEG_SLOPE * y)

    # Halo-only zeroing: top/bottom pad rows + left/right pad columns (interior is
    # fully overwritten right after, so no full-buffer memset each grid step).
    a_ref[0:pad, :, :] = jnp.zeros((pad, Wp, Cin), a_ref.dtype)
    a_ref[pad + H:Hp, :, :] = jnp.zeros((pad, Wp, Cin), a_ref.dtype)
    a_ref[pad:pad + H, 0:pad, :] = jnp.zeros((H, pad, Cin), a_ref.dtype)
    a_ref[pad:pad + H, pad + W:Wp, :] = jnp.zeros((H, pad, Cin), a_ref.dtype)
    a_ref[pad:pad + H, pad:pad + W, :] = y[0].astype(a_ref.dtype)

    # im2col staging: fold the 9 taps into the contraction -> ONE MXU matmul with K = 9*Cin.
    # (Each shifted-window reshape materializes a small VMEM copy either way; the single
    #  wide-K matmul gets far better MXU utilization than 9 tiny-K tap matmuls.)
    for t in range(KS * KS):
        ky, kx = t // KS, t % KS
        win = a_ref[ky:ky + H, kx:kx + W, :]          # (H, W, Cin) shifted view of the pad buf
        col_ref[:, t * Cin:(t + 1) * Cin] = win.reshape(H * W, Cin)

    out = jnp.dot(col_ref[...], wc_ref[...], preferred_element_type=jnp.float32)
    out = out + bc_ref[...]                           # (H*W, Cout), f32

    if transpose_out:
        # Cout < 128: lane-dense (Cout, H*W) store; global (B, Cout, H*W) is NCHW after a
        # free wrapper reshape.
        o_ref[...] = jnp.transpose(out, (1, 0))[None].astype(o_ref.dtype)
    else:
        # Cout >= 128: (H*W, Cout) is already lane-dense; NCHW permute happens outside.
        o_ref[...] = out[None].astype(o_ref.dtype)


# ------------------------------ parameter prep (outside hot path) ------------

def _power_iteration_sigma(w2d, iters=50):
    # TODO(synk): torch's spectral_norm keeps stateful u/v buffers and does ONE power-iteration
    # step per forward; here sigma is computed to convergence once, outside the hot path.
    v = jnp.full((w2d.shape[1],), 1.0 / jnp.sqrt(float(w2d.shape[1])), w2d.dtype)
    u = w2d @ v
    for _ in range(iters):
        u = w2d @ v
        u = u / (jnp.linalg.norm(u) + 1e-12)
        v = w2d.T @ u
        v = v / (jnp.linalg.norm(v) + 1e-12)
    return jnp.dot(u, w2d @ v)


def init_params(key, style_channels, in_channels, out_channels, sz=KS):
    k1, k2, k3, k4 = jax.random.split(key, 4)
    w_lin = jax.random.normal(k1, (in_channels, style_channels), jnp.float32) \
        * (1.0 / jnp.sqrt(float(style_channels)))
    b_lin = jax.random.normal(k2, (in_channels,), jnp.float32) * 0.1
    gamma = jnp.ones((in_channels,), jnp.float32)        # BatchNorm2d default init
    beta = jnp.zeros((in_channels,), jnp.float32)
    fan_in = in_channels * sz * sz
    w_conv = jax.random.normal(k3, (out_channels, in_channels, sz, sz), jnp.float32) \
        * (1.0 / jnp.sqrt(float(fan_in)))
    b_conv = jax.random.normal(k4, (out_channels,), jnp.float32) * 0.1
    return dict(w_lin=w_lin, b_lin=b_lin, gamma=gamma, beta=beta,
                w_conv=w_conv, b_conv=b_conv)


def prepare_params(params):
    """One-time weight prep: spectral norm + conv-weight relayout/cast for the kernel."""
    Cout, Cin, _, _ = params["w_conv"].shape
    w_lin_sn = params["w_lin"] / _power_iteration_sigma(params["w_lin"])
    w_conv_sn = params["w_conv"] / _power_iteration_sigma(params["w_conv"].reshape(Cout, -1))
    # (Cout, Cin, KS, KS) -> (KS, KS, Cin, Cout) -> (KS*KS*Cin, Cout): row order matches the
    # im2col lane layout (tap-major, Cin-minor). Pre-cast to CONV_DTYPE (no in-kernel cast).
    wc = jnp.transpose(w_conv_sn, (2, 3, 1, 0)).reshape(KS * KS * Cin, Cout).astype(CONV_DTYPE)
    return dict(w_lin_sn=w_lin_sn, b_lin=params["b_lin"],
                gamma=params["gamma"], beta=params["beta"],
                wc=wc, bc=params["b_conv"].reshape(1, Cout).astype(jnp.float32),
                w_conv_sn=w_conv_sn)


# ------------------------------ forward ------------------------------------

def _physical_vmem_bytes():
    try:
        return int(pltpu.get_tpu_info().vmem_capacity_bytes)
    except Exception:
        return 64 << 20   # conservative default (v7x-sized VMEM)


def _vmem_limit_bytes(pipelined_bytes, scratch_bytes=0):
    """Scoped VMEM limit: 2x double-buffered pipelined blocks + 1x scratch + headroom for
    Mosaic internals, capped at ~85% of the queried physical VMEM (generation-aware)."""
    want = 2 * int(pipelined_bytes) + int(scratch_bytes) + (4 << 20)
    cap = int(_physical_vmem_bytes() * 0.85)
    return int(min(max(want, 16 << 20), cap))


def bnconv_style_forward(x_nchw, style, prepared):
    B, Cin, H, W = x_nchw.shape
    Cout = prepared["wc"].shape[-1]
    pad = KS // 2
    Hp, Wp = H + 2 * pad, W + 2 * pad
    f32 = jnp.dtype(jnp.float32).itemsize
    cvi = jnp.dtype(CONV_DTYPE).itemsize

    # Style projection: tiny (B,S)@(S,Cin) matmul, plain XLA (no extra kernel launch).
    s = style @ prepared["w_lin_sn"].T + prepared["b_lin"]            # (B, Cin)

    # Layout glue: NCHW -> NHWC (pixels -> sublanes, channels -> lanes inside the kernels).
    # TODO(synk): fuse this relayout (and the +style) into the stats kernel to save one full
    # HBM pass over x; kept as one XLA transpose here for lowering robustness.
    x_nhwc = jnp.transpose(x_nchw, (0, 2, 3, 1))

    # ---- kernel 1: per-batch BN batch stats (sum, sum^2), grid over B, parallel ----
    stats_pipelined = f32 * (H * W * Cin + Cin + 2 * Cin)
    stats = pl.pallas_call(
        bn_stats_kernel,
        grid=(B,),
        in_specs=[pl.BlockSpec((1, H, W, Cin), lambda b: (b, 0, 0, 0)),
                  pl.BlockSpec((1, 1, Cin), lambda b: (b, 0, 0))],
        out_specs=pl.BlockSpec((1, 2, Cin), lambda b: (b, 0, 0)),
        out_shape=jax.ShapeDtypeStruct((B, 2, Cin), jnp.float32),
        compiler_params=pltpu.CompilerParams(
            dimension_semantics=("parallel",),
            vmem_limit_bytes=_vmem_limit_bytes(stats_pipelined)),
    )(x_nhwc, s.reshape(B, 1, Cin))

    # ---- per-channel combine + affine fold: tiny vectors, plain XLA ----
    n = float(B * H * W)
    tot = jnp.sum(stats, axis=0)                        # (2, Cin)
    mean = tot[0] / n
    var = tot[1] / n - mean * mean                      # single-pass biased batch variance
    # TODO(synk): E[z^2]-mean^2 can cancel if |mean| >> std; use a two-pass stats kernel then.
    scale = prepared["gamma"] * lax.rsqrt(var + EPS)    # (Cin,)
    shift = (s - mean) * scale + prepared["beta"]       # (B, Cin): style + BN shift folded

    # ---- kernel 2: fused BN-affine + LeakyReLU + im2col + 3x3 conv (MXU) ----
    transpose_out = Cout < 128          # static layout choice (no try/except / double tracing)
    if transpose_out:
        out_shape = jax.ShapeDtypeStruct((B, Cout, H * W), jnp.float32)
        out_spec = pl.BlockSpec((1, Cout, H * W), lambda b: (b, 0, 0))
    else:
        out_shape = jax.ShapeDtypeStruct((B, H * W, Cout), jnp.float32)
        out_spec = pl.BlockSpec((1, H * W, Cout), lambda b: (b, 0, 0))

    conv_pipelined = (f32 * (H * W * Cin + 2 * Cin + Cout + Cout * H * W)
                      + cvi * (KS * KS * Cin * Cout))
    conv_scratch = cvi * (Hp * Wp * Cin + H * W * KS * KS * Cin)

    out = pl.pallas_call(
        functools.partial(norm_conv_kernel, transpose_out=transpose_out),
        grid=(B,),
        in_specs=[pl.BlockSpec((1, H, W, Cin), lambda b: (b, 0, 0, 0)),
                  pl.BlockSpec((1, 1, Cin), lambda b: (0, 0, 0)),
                  pl.BlockSpec((1, 1, Cin), lambda b: (b, 0, 0)),
                  pl.BlockSpec((KS * KS * Cin, Cout), lambda b: (0, 0)),
                  pl.BlockSpec((1, Cout), lambda b: (0, 0))],
        out_specs=out_spec,
        out_shape=out_shape,
        scratch_shapes=[pltpu.VMEM((Hp, Wp, Cin), CONV_DTYPE),
                        pltpu.VMEM((H * W, KS * KS * Cin), CONV_DTYPE)],
        compiler_params=pltpu.CompilerParams(
            dimension_semantics=("parallel",),
            vmem_limit_bytes=_vmem_limit_bytes(conv_pipelined, conv_scratch)),
    )(x_nhwc, scale.reshape(1, 1, Cin), shift.reshape(B, 1, Cin),
      prepared["wc"], prepared["bc"])

    # TODO(synk): for v7x-sized feature maps (64 MiB VMEM), add an H-tiled grid axis with a
    # halo-aware fetch (manual DMA of the pad rows) for both kernels; per-batch blocking is
    # kept here since it is correct and comfortably within VMEM at these shapes.
    if transpose_out:
        return out.reshape(B, Cout, H, W)               # (B, Cout, H*W) is already NCHW-flat
    return jnp.transpose(out.reshape(B, H, W, Cout), (0, 3, 1, 2))


# ------------------------------ reference (pure JAX) --------------------------

def reference_forward(x, style, prepared):
    s = style @ prepared["w_lin_sn"].T + prepared["b_lin"]
    z = x + s[:, :, None, None]
    mean = jnp.mean(z, axis=(0, 2, 3), keepdims=True)
    var = jnp.mean((z - mean) ** 2, axis=(0, 2, 3), keepdims=True)
    y = (z - mean) / jnp.sqrt(var + EPS)
    y = y * prepared["gamma"][None, :, None, None] + prepared["beta"][None, :, None, None]
    y = jnp.where(y >= 0.0, y, NEG_SLOPE * y)
    out = lax.conv_general_dilated(
        y, prepared["w_conv_sn"], window_strides=(1, 1), padding="SAME",
        dimension_numbers=("NCHW", "OIHW", "NCHW"),
        precision=lax.Precision.HIGHEST)
    return out + prepared["bc"].reshape(1, -1, 1, 1)


if __name__ == "__main__":
    B, S, Cin, Cout, H, W = 2, 8, 4, 8, 16, 16
    key = jax.random.PRNGKey(0)
    kx, ks, kp = jax.random.split(key, 3)
    x = jax.random.normal(kx, (B, Cin, H, W), jnp.float32)
    style = jax.random.normal(ks, (B, S), jnp.float32)
    params = init_params(kp, S, Cin, Cout)
    prepared = prepare_params(params)            # one-time: spectral norm + weight relayout/cast

    out = jax.block_until_ready(bnconv_style_forward(x, style, prepared))
    assert out.shape == (B, Cout, H, W), out.shape

    ref = jax.block_until_ready(reference_forward(x, style, prepared))
    max_err = float(jnp.max(jnp.abs(out - ref)))
    # bf16 MXU operands (f32 accumulation) vs an f32/HIGHEST reference -> relaxed tolerance.
    if not bool(jnp.allclose(out, ref, atol=5e-2, rtol=5e-2)):
        raise AssertionError(f"Pallas result mismatch vs reference, max abs err = {max_err}")
    print("KERNEL_OK")
</pallas_src>

<mosaic_0001>
module attributes {stable_mosaic.version = 11 : i64} {
  func.func @bn_stats_kernel(%arg0: i32, %arg1: memref<1x16x16x4xf32, #tpu.memory_space<vmem>>, %arg2: memref<1x1x4xf32, #tpu.memory_space<vmem>>, %arg3: memref<1x2x4xf32, #tpu.memory_space<vmem>>) attributes {dimension_semantics = [#tpu.dimension_semantics<parallel>], iteration_bounds = array<i64: 2>, scalar_prefetch = 0 : i64, scratch_operands = 0 : i64, tpu.core_type = #tpu.core_type<tc>, window_params = [{transform_indices = @transform_0, window_bounds = array<i64: 1, 16, 16, 4>}, {transform_indices = @transform_1, window_bounds = array<i64: 1, 1, 4>}, {transform_indices = @transform_2, window_bounds = array<i64: 1, 2, 4>}]} {
    %c0 = arith.constant 0 : index
    %c0_0 = arith.constant 0 : index
    %c0_1 = arith.constant 0 : index
    %c0_2 = arith.constant 0 : index
    %0 = vector.load %arg1[%c0, %c0_0, %c0_1, %c0_2] : memref<1x16x16x4xf32, #tpu.memory_space<vmem>>, vector<1x16x16x4xf32>
    %c0_3 = arith.constant 0 : index
    %c0_4 = arith.constant 0 : index
    %c0_5 = arith.constant 0 : index
    %1 = vector.load %arg2[%c0_3, %c0_4, %c0_5] : memref<1x1x4xf32, #tpu.memory_space<vmem>>, vector<1x1x4xf32>
    %2 = vector.shape_cast %1 : vector<1x1x4xf32> to vector<1x1x1x4xf32>
    %3 = vector.broadcast %2 : vector<1x1x1x4xf32> to vector<1x16x16x4xf32>
    %4 = arith.addf %0, %3 : vector<1x16x16x4xf32>
    %cst = arith.constant dense<0.000000e+00> : vector<16x4xf32>
    %5 = vector.multi_reduction <add>, %4, %cst [0, 1] : vector<1x16x16x4xf32> to vector<16x4xf32>
    %6 = arith.mulf %4, %4 : vector<1x16x16x4xf32>
    %cst_6 = arith.constant dense<0.000000e+00> : vector<16x4xf32>
    %7 = vector.multi_reduction <add>, %6, %cst_6 [0, 1] : vector<1x16x16x4xf32> to vector<16x4xf32>
    %cst_7 = arith.constant dense<0.000000e+00> : vector<4xf32>
    %8 = vector.multi_reduction <add>, %5, %cst_7 [0] : vector<16x4xf32> to vector<4xf32>
    %9 = vector.shape_cast %8 : vector<4xf32> to vector<1x4xf32>
    %c0_8 = arith.constant 0 : index
    %c0_9 = arith.constant 0 : index
    %c0_10 = arith.constant 0 : index
    %10 = vector.load %arg3[%c0_8, %c0_9, %c0_10] : memref<1x2x4xf32, #tpu.memory_space<vmem>>, vector<1x1x4xf32>
    %11 = vector.shape_cast %10 : vector<1x1x4xf32> to vector<1x4xf32>
    %12 = vector.shape_cast %9 : vector<1x4xf32> to vector<1x1x4xf32>
    tpu.vector_store %arg3[%c0_8, %c0_9, %c0_10], %12 {strides = array<i32>} : memref<1x2x4xf32, #tpu.memory_space<vmem>>, vector<1x1x4xf32>,
    %cst_11 = arith.constant dense<0.000000e+00> : vector<4xf32>
    %13 = vector.multi_reduction <add>, %7, %cst_11 [0] : vector<16x4xf32> to vector<4xf32>
    %14 = vector.shape_cast %13 : vector<4xf32> to vector<1x4xf32>
    %c0_12 = arith.constant 0 : index
    %c1 = arith.constant 1 : index
    %c0_13 = arith.constant 0 : index
    %15 = vector.load %arg3[%c0_12, %c1, %c0_13] : memref<1x2x4xf32, #tpu.memory_space<vmem>>, vector<1x1x4xf32>
    %16 = vector.shape_cast %15 : vector<1x1x4xf32> to vector<1x4xf32>
    %17 = vector.shape_cast %14 : vector<1x4xf32> to vector<1x1x4xf32>
    tpu.vector_store %arg3[%c0_12, %c1, %c0_13], %17 {strides = array<i32>} : memref<1x2x4xf32, #tpu.memory_space<vmem>>, vector<1x1x4xf32>,
    return
  }
  func.func @transform_0(%arg0: i32) -> (i32, i32, i32, i32) {
    %c0_i32 = arith.constant 0 : i32
    %c0_i32_0 = arith.constant 0 : i32
    %c0_i32_1 = arith.constant 0 : i32
    %c0_i32_2 = arith.constant 0 : i32
    return %arg0, %c0_i32, %c0_i32_0, %c0_i32_1 : i32, i32, i32, i32
  }
  func.func @transform_1(%arg0: i32) -> (i32, i32, i32) {
    %c0_i32 = arith.constant 0 : i32
    %c0_i32_0 = arith.constant 0 : i32
    %c0_i32_1 = arith.constant 0 : i32
    return %arg0, %c0_i32, %c0_i32_0 : i32, i32, i32
  }
  func.func @transform_2(%arg0: i32) -> (i32, i32, i32) {
    %c0_i32 = arith.constant 0 : i32
    %c0_i32_0 = arith.constant 0 : i32
    %c0_i32_1 = arith.constant 0 : i32
    return %arg0, %c0_i32, %c0_i32_0 : i32, i32, i32
  }
}

</mosaic_0001>

<llo_original>
// kernel: tpu_custom_call.1
$region0: #{tpu_custom_call.1}
  #allocation0 [shape = 'u32[]', space=smem, size = 0x4, offset = 0x4, fixed_abs, tag = 'smem constant byte address 0x4 - core index']
  #allocation1 [shape = 'u32[144,128]{1,0:T(1,128)}', space=vmem, size = 0x12000, scoped, tag = 'internal scratch']
  %s0 = inlined_call_operand.vmem [shape: f32[2,16,16,4], index: 0, kind: input, shape index: {}]
  %s1 = inlined_call_operand.vmem [shape: f32[2,1,4], index: 1, kind: input, shape index: {}]
  %s2 = inlined_call_operand.hbm [shape: f32[2,2,4], index: 2, kind: output, shape index: {}]
  %s3 = sld [smem:[#allocation0]]
  $region41: #{tpu_custom_call.1} parent=0
    _
  %s5 = ssub.s32 1, %s3
  %s6 = scalar_select 0, %s5, %s3
  $region1: #{tpu_custom_call.1} parent=0
    #allocation2 [shape = 'u8[2048]{0}', space=vmem, size = 0x800, scoped, tag = 'output window, operand 0']
    #allocation3 [shape = 's32[2]{0}', space=sflag, size = 0x8, scoped, tag = 'scoped memory for tpu_custom_call.1']
    %7 = vsyncpa [#allocation3], 0
    %s8 = scalar_lea.sflag [#allocation3], 1
    %9 = vsyncpa %s8, 0
    loop: start=0, step=1, limit=4
    $region2: #{tpu_custom_call.1} parent=1 // loop_pre_header
      _
    $region3: #{tpu_custom_call.1} parent=1 // loop_header
      %s11 = sphi 0, %s15
      %p12 = scmp.ge.s32.totalorder %s11, 4
      %s21 = sphi 0, %s23
      %s24 = sphi 0, %s21
      %s25 = sphi 0, %s24
      %s41 = sphi 0, %s25
      %s47 = sphi 0, %s49
      %s50 = sphi 0, %s47
      %s51 = sphi 0, %s50
      %s67 = sphi 0, %s51
      %s73 = sphi 0, %s75
      %s76 = sphi 0, %s73
      %s77 = sphi 0, %s76
      %s93 = sphi 0, %s77
    $region4: #{tpu_custom_call.1} parent=1 // loop_header_branch
      %14 = sbr.rel (%p12) target = $region8
    $region5: #{tpu_custom_call.1} parent=1 // loop_body
      %s16 = ssub.s32 %s11, 1
      %s17 = ssub.s32 %s11, 2
      %s18 = sadd.s32 %s11, 1
      %s19 = ssub.s32 %s11, %s18
      %p20 = scmp.eq.s32.totalorder %s19, 0
      %s22 = sadd.s32 %s21, 1
      %s23 = scalar_select %p20, %s21, %s22
      %p26 = pneg %p20
      %p27 = scmp.eq.s32.totalorder %s11, 1
      %p28 = por %p26, %p27
      %p29 = scmp.ne.s32.totalorder %s21, %s24
      %p30 = scmp.eq.s32.totalorder %s11, 0
      %p31 = por %p29, %p30
      %p32 = scmp.ne.s32.totalorder %s21, %s24
      %p33 = scmp.eq.s32.totalorder %s16, 1
      %p34 = por %p32, %p33
      %p35 = scmp.ne.s32.totalorder %s24, %s25
      %p36 = scmp.eq.s32.totalorder %s16, 0
      %p37 = por %p35, %p36
      %p38 = scmp.ne.s32.totalorder %s24, %s25
      %p39 = scmp.eq.s32.totalorder %s17, 1
      %p40 = por %p38, %p39
      %p42 = scmp.ne.s32.totalorder %s25, %s41
      %p43 = scmp.eq.s32.totalorder %s17, 0
      %p44 = por %p42, %p43
      %s45 = ssub.s32 %s11, %s18
      %p46 = scmp.eq.s32.totalorder %s45, 0
      %s48 = sadd.s32 %s47, 1
      %s49 = scalar_select %p46, %s47, %s48
      %p52 = pneg %p46
      %p53 = scmp.eq.s32.totalorder %s11, 1
      %p54 = por %p52, %p53
      %p55 = scmp.ne.s32.totalorder %s47, %s50
      %p56 = scmp.eq.s32.totalorder %s11, 0
      %p57 = por %p55, %p56
      %p58 = scmp.ne.s32.totalorder %s47, %s50
      %p59 = scmp.eq.s32.totalorder %s16, 1
      %p60 = por %p58, %p59
      %p61 = scmp.ne.s32.totalorder %s50, %s51
      %p62 = scmp.eq.s32.totalorder %s16, 0
      %p63 = por %p61, %p62
      %p64 = scmp.ne.s32.totalorder %s50, %s51
      %p65 = scmp.eq.s32.totalorder %s17, 1
      %p66 = por %p64, %p65
      %p68 = scmp.ne.s32.totalorder %s51, %s67
      %p69 = scmp.eq.s32.totalorder %s17, 0
      %p70 = por %p68, %p69
      %s71 = ssub.s32 %s11, %s18
      %p72 = scmp.eq.s32.totalorder %s71, 0
      %s74 = sadd.s32 %s73, 1
      %s75 = scalar_select %p72, %s73, %s74
      %p78 = pneg %p72
      %p79 = scmp.eq.s32.totalorder %s11, 1
      %p80 = por %p78, %p79
      %p81 = scmp.ne.s32.totalorder %s73, %s76
      %p82 = scmp.eq.s32.totalorder %s11, 0
      %p83 = por %p81, %p82
      %p84 = scmp.ne.s32.totalorder %s73, %s76
      %p85 = scmp.eq.s32.totalorder %s16, 1
      %p86 = por %p84, %p85
      %p87 = scmp.ne.s32.totalorder %s76, %s77
      %p88 = scmp.eq.s32.totalorder %s16, 0
      %p89 = por %p87, %p88
      %p90 = scmp.ne.s32.totalorder %s76, %s77
      %p91 = scmp.eq.s32.totalorder %s17, 1
      %p92 = por %p90, %p91
      %p94 = scmp.ne.s32.totalorder %s77, %s93
      %p95 = scmp.eq.s32.totalorder %s17, 0
      %p96 = por %p94, %p95
      %p97 = scmp.le.s32.totalorder 1, %s11
      %p98 = scmp.lt.s32.totalorder %s11, 3
      %p99 = pnand %p97, %p98
      %p100 = pneg %p99
      // Predicated region
      $region9: #{tpu_custom_call.1} parent=5 // pred_check
        _
      $region10: #{tpu_custom_call.1} parent=5 // pred_check_branch
        %102 = sbr.rel (%p99) target = $region12
      $region11: #{tpu_custom_call.1} parent=5 // pred_region
        %s103 = ssub.s32 %s11, 1
      $region12: #{tpu_custom_call.1} parent=5 // pred_fallthru
        _
      %p104 = scmp.lt.s32.totalorder %s11, 2
      // Predicated region
      $region13: #{tpu_custom_call.1} parent=5 // pred_check
        %p105 = pneg %p104
      $region14: #{tpu_custom_call.1} parent=5 // pred_check_branch
        %107 = sbr.rel (%p105) target = $region16
      $region15: #{tpu_custom_call.1} parent=5 // pred_region
        // Predicated region
        $region17: #{tpu_custom_call.1} parent=15 // pred_check
          %p108 = pneg %p31
        $region18: #{tpu_custom_call.1} parent=15 // pred_check_branch
          %110 = sbr.rel (%p108) target = $region20
        $region19: #{tpu_custom_call.1} parent=15 // pred_region
          %p111 = scmp.lt.s32.totalorder %s11, 1
          %s112 = scalar_select %p111, %s11, 1
          %s113 = smul.addr %s112, 32
          %s114 = smul.addr %s113, 8
          %s115 = scalar_lea.vmem %s0, %s114
        $region20: #{tpu_custom_call.1} parent=15 // pred_fallthru
          _
        // Predicated region
        $region21: #{tpu_custom_call.1} parent=15 // pred_check
          %p116 = pneg %p57
        $region22: #{tpu_custom_call.1} parent=15 // pred_check_branch
          %118 = sbr.rel (%p116) target = $region24
        $region23: #{tpu_custom_call.1} parent=15 // pred_region
          %p119 = scmp.lt.s32.totalorder %s11, 1
          %s120 = scalar_select %p119, %s11, 1
          %s121 = scalar_lea.vmem %s1, %s120
        $region24: #{tpu_custom_call.1} parent=15 // pred_fallthru
          _
      $region16: #{tpu_custom_call.1} parent=5 // pred_fallthru
        _
      %p122 = scmp.le.s32.totalorder 1, %s11
      %p123 = scmp.lt.s32.totalorder %s11, 3
      %p124 = pnand %p122, %p123
      %p125 = pneg %p124
      // Predicated region
      $region25: #{tpu_custom_call.1} parent=5 // pred_check
        _
      $region26: #{tpu_custom_call.1} parent=5 // pred_check_branch
        %127 = sbr.rel (%p124) target = $region28
      $region27: #{tpu_custom_call.1} parent=5 // pred_region
        %s128 = ssub.s32 %s11, 1
        %p129 = scmp.lt.s32.totalorder %s16, 1
        %s130 = scalar_select %p129, %s16, 1
        %s131 = smul.addr %s130, 32
        %s132 = smul.addr %s131, 8
        %s133 = scalar_lea.vmem %s0, %s132
        %p134 = pneg %p37
        %p135 = pneg %p34
        %p136 = scmp.lt.s32.totalorder %s16, 1
        %s137 = scalar_select %p136, %s16, 1
        %s138 = scalar_lea.vmem %s1, %s137
        %p139 = pneg %p63
        %p140 = pneg %p60
        %p141 = pneg %p89
        %p142 = pneg %p86
        %s143 = sand.u32 %s76, 1
        %s144 = scalar_lea.sflag [#allocation3], %s143
        %s145 = sand.u32 %s76, 1
        %s146 = smul.addr %s145, 2
        %s147 = scalar_lea.vmem [#allocation2], %s146
        %p148 = scmp.lt.s32.totalorder %s16, 1
        %s149 = scalar_select %p148, %s16, 1
        %s150 = smul.addr %s149, 32
        %s151 = smul.addr %s150, 8
        %s152 = scalar_lea.vmem %s0, %s151
        %p153 = scmp.lt.s32.totalorder %s16, 1
        %s154 = scalar_select %p153, %s16, 1
        %s155 = scalar_lea.vmem %s1, %s154
        %v156 = vld [vmem:[%s152] sm:$0xff]
        %v157 = vld [vmem:[%s152 + $0x8] sm:$0xff]
        %v158 = vld [vmem:[%s152 + $0x10] sm:$0xff]
        %v159 = vld [vmem:[%s152 + $0x18] sm:$0xff]
        %v160 = vld [vmem:[%s152 + $0x20] sm:$0xff]
        %v161 = vld [vmem:[%s152 + $0x28] sm:$0xff]
        %v162 = vld [vmem:[%s152 + $0x30] sm:$0xff]
        %v163 = vld [vmem:[%s152 + $0x38] sm:$0xff]
        %v164 = vld [vmem:[%s152 + $0x40] sm:$0xff]
        %v165 = vld [vmem:[%s152 + $0x48] sm:$0xff]
        %v166 = vld [vmem:[%s152 + $0x50] sm:$0xff]
        %v167 = vld [vmem:[%s152 + $0x58] sm:$0xff]
        %v168 = vld [vmem:[%s152 + $0x60] sm:$0xff]
        %v169 = vld [vmem:[%s152 + $0x68] sm:$0xff]
        %v170 = vld [vmem:[%s152 + $0x70] sm:$0xff]
        %v171 = vld [vmem:[%s152 + $0x78] sm:$0xff]
        %v172 = vld [vmem:[%s152 + $0x80] sm:$0xff]
        %v173 = vld [vmem:[%s152 + $0x88] sm:$0xff]
        %v174 = vld [vmem:[%s152 + $0x90] sm:$0xff]
        %v175 = vld [vmem:[%s152 + $0x98] sm:$0xff]
        %v176 = vld [vmem:[%s152 + $0xa0] sm:$0xff]
        %v177 = vld [vmem:[%s152 + $0xa8] sm:$0xff]
        %v178 = vld [vmem:[%s152 + $0xb0] sm:$0xff]
        %v179 = vld [vmem:[%s152 + $0xb8] sm:$0xff]
        %v180 = vld [vmem:[%s152 + $0xc0] sm:$0xff]
        %v181 = vld [vmem:[%s152 + $0xc8] sm:$0xff]
        %v182 = vld [vmem:[%s152 + $0xd0] sm:$0xff]
        %v183 = vld [vmem:[%s152 + $0xd8] sm:$0xff]
        %v184 = vld [vmem:[%s152 + $0xe0] sm:$0xff]
        %v185 = vld [vmem:[%s152 + $0xe8] sm:$0xff]
        %v186 = vld [vmem:[%s152 + $0xf0] sm:$0xff]
        %v187 = vld [vmem:[%s152 + $0xf8] sm:$0xff]
        %v188 = vld [vmem:[%s155] sm:$0x1]
        %v190 = vlaneseq
        %v191 = vshrl.u32 %v190, 7
        %v192 = vsub.s32 0, %v191
        %v193 = vrot.slane %v188, %v192
        %v195 = vadd.f32 %v156, %v193
        %v196 = vadd.f32 %v157, %v193
        %v197 = vadd.f32 %v158, %v193
        %v198 = vadd.f32 %v159, %v193
        %v199 = vadd.f32 %v160, %v193
        %v200 = vadd.f32 %v161, %v193
        %v201 = vadd.f32 %v162, %v193
        %v202 = vadd.f32 %v163, %v193
        %v203 = vadd.f32 %v164, %v193
        %v204 = vadd.f32 %v165, %v193
        %v205 = vadd.f32 %v166, %v193
        %v206 = vadd.f32 %v167, %v193
        %v207 = vadd.f32 %v168, %v193
        %v208 = vadd.f32 %v169, %v193
        %v209 = vadd.f32 %v170, %v193
        %v210 = vadd.f32 %v171, %v193
        %v211 = vadd.f32 %v172, %v193
        %v212 = vadd.f32 %v173, %v193
        %v213 = vadd.f32 %v174, %v193
        %v214 = vadd.f32 %v175, %v193
        %v215 = vadd.f32 %v176, %v193
        %v216 = vadd.f32 %v177, %v193
        %v217 = vadd.f32 %v178, %v193
        %v218 = vadd.f32 %v179, %v193
        %v219 = vadd.f32 %v180, %v193
        %v220 = vadd.f32 %v181, %v193
        %v221 = vadd.f32 %v182, %v193
        %v222 = vadd.f32 %v183, %v193
        %v223 = vadd.f32 %v184, %v193
        %v224 = vadd.f32 %v185, %v193
        %v225 = vadd.f32 %v186, %v193
        %v226 = vadd.f32 %v187, %v193
        %vm227 = vcmask 31744
        %v228 = vsel %vm227, %v195, 0.0
        %v229 = vsel %vm227, %v197, 0.0
        %v230 = vadd.f32 %v228, %v229
        %v231 = vsel %vm227, %v199, 0.0
        %v232 = vadd.f32 %v230, %v231
        %v233 = vsel %vm227, %v201, 0.0
        %v234 = vadd.f32 %v232, %v233
        %v235 = vsel %vm227, %v203, 0.0
        %v236 = vadd.f32 %v234, %v235
        %v237 = vsel %vm227, %v205, 0.0
        %v238 = vadd.f32 %v236, %v237
        %v239 = vsel %vm227, %v207, 0.0
        %v240 = vadd.f32 %v238, %v239
        %v241 = vsel %vm227, %v209, 0.0
        %v242 = vadd.f32 %v240, %v241
        %v243 = vsel %vm227, %v211, 0.0
        %v244 = vadd.f32 %v242, %v243
        %v245 = vsel %vm227, %v213, 0.0
        %v246 = vadd.f32 %v244, %v245
        %v247 = vsel %vm227, %v215, 0.0
        %v248 = vadd.f32 %v246, %v247
        %v249 = vsel %vm227, %v217, 0.0
        %v250 = vadd.f32 %v248, %v249
        %v251 = vsel %vm227, %v219, 0.0
        %v252 = vadd.f32 %v250, %v251
        %v253 = vsel %vm227, %v221, 0.0
        %v254 = vadd.f32 %v252, %v253
        %v255 = vsel %vm227, %v223, 0.0
        %v256 = vadd.f32 %v254, %v255
        %v257 = vsel %vm227, %v225, 0.0
        %v258 = vadd.f32 %v256, %v257
        %v259 = vsel %vm227, %v196, 0.0
        %v260 = vsel %vm227, %v198, 0.0
        %v261 = vadd.f32 %v259, %v260
        %v262 = vsel %vm227, %v200, 0.0
        %v263 = vadd.f32 %v261, %v262
        %v264 = vsel %vm227, %v202, 0.0
        %v265 = vadd.f32 %v263, %v264
        %v266 = vsel %vm227, %v204, 0.0
        %v267 = vadd.f32 %v265, %v266
        %v268 = vsel %vm227, %v206, 0.0
        %v269 = vadd.f32 %v267, %v268
        %v270 = vsel %vm227, %v208, 0.0
        %v271 = vadd.f32 %v269, %v270
        %v272 = vsel %vm227, %v210, 0.0
        %v273 = vadd.f32 %v271, %v272
        %v274 = vsel %vm227, %v212, 0.0
        %v275 = vadd.f32 %v273, %v274
        %v276 = vsel %vm227, %v214, 0.0
        %v277 = vadd.f32 %v275, %v276
        %v278 = vsel %vm227, %v216, 0.0
        %v279 = vadd.f32 %v277, %v278
        %v280 = vsel %vm227, %v218, 0.0
        %v281 = vadd.f32 %v279, %v280
        %v282 = vsel %vm227, %v220, 0.0
        %v283 = vadd.f32 %v281, %v282
        %v284 = vsel %vm227, %v222, 0.0
        %v285 = vadd.f32 %v283, %v284
        %v286 = vsel %vm227, %v224, 0.0
        %v287 = vadd.f32 %v285, %v286
        %v288 = vsel %vm227, %v226, 0.0
        %v289 = vadd.f32 %v287, %v288
        %v290 = vmul.f32 %v195, %v195
        %v291 = vmul.f32 %v196, %v196
        %v292 = vmul.f32 %v197, %v197
        %v293 = vmul.f32 %v198, %v198
        %v294 = vmul.f32 %v199, %v199
        %v295 = vmul.f32 %v200, %v200
        %v296 = vmul.f32 %v201, %v201
        %v297 = vmul.f32 %v202, %v202
        %v298 = vmul.f32 %v203, %v203
        %v299 = vmul.f32 %v204, %v204
        %v300 = vmul.f32 %v205, %v205
        %v301 = vmul.f32 %v206, %v206
        %v302 = vmul.f32 %v207, %v207
        %v303 = vmul.f32 %v208, %v208
        %v304 = vmul.f32 %v209, %v209
        %v305 = vmul.f32 %v210, %v210
        %v306 = vmul.f32 %v211, %v211
        %v307 = vmul.f32 %v212, %v212
        %v308 = vmul.f32 %v213, %v213
        %v309 = vmul.f32 %v214, %v214
        %v310 = vmul.f32 %v215, %v215
        %v311 = vmul.f32 %v216, %v216
        %v312 = vmul.f32 %v217, %v217
        %v313 = vmul.f32 %v218, %v218
        %v314 = vmul.f32 %v219, %v219
        %v315 = vmul.f32 %v220, %v220
        %v316 = vmul.f32 %v221, %v221
        %v317 = vmul.f32 %v222, %v222
        %v318 = vmul.f32 %v223, %v223
        %v319 = vmul.f32 %v224, %v224
        %v320 = vmul.f32 %v225, %v225
        %v321 = vmul.f32 %v226, %v226
        %v322 = vsel %vm227, %v290, 0.0
        %v323 = vsel %vm227, %v292, 0.0
        %v324 = vadd.f32 %v322, %v323
        %v325 = vsel %vm227, %v294, 0.0
        %v326 = vadd.f32 %v324, %v325
        %v327 = vsel %vm227, %v296, 0.0
        %v328 = vadd.f32 %v326, %v327
        %v329 = vsel %vm227, %v298, 0.0
        %v330 = vadd.f32 %v328, %v329
        %v331 = vsel %vm227, %v300, 0.0
        %v332 = vadd.f32 %v330, %v331
        %v333 = vsel %vm227, %v302, 0.0
        %v334 = vadd.f32 %v332, %v333
        %v335 = vsel %vm227, %v304, 0.0
        %v336 = vadd.f32 %v334, %v335
        %v337 = vsel %vm227, %v306, 0.0
        %v338 = vadd.f32 %v336, %v337
        %v339 = vsel %vm227, %v308, 0.0
        %v340 = vadd.f32 %v338, %v339
        %v341 = vsel %vm227, %v310, 0.0
        %v342 = vadd.f32 %v340, %v341
        %v343 = vsel %vm227, %v312, 0.0
        %v344 = vadd.f32 %v342, %v343
        %v345 = vsel %vm227, %v314, 0.0
        %v346 = vadd.f32 %v344, %v345
        %v347 = vsel %vm227, %v316, 0.0
        %v348 = vadd.f32 %v346, %v347
        %v349 = vsel %vm227, %v318, 0.0
        %v350 = vadd.f32 %v348, %v349
        %v351 = vsel %vm227, %v320, 0.0
        %v352 = vadd.f32 %v350, %v351
        %v353 = vsel %vm227, %v291, 0.0
        %v354 = vsel %vm227, %v293, 0.0
        %v355 = vadd.f32 %v353, %v354
        %v356 = vsel %vm227, %v295, 0.0
        %v357 = vadd.f32 %v355, %v356
        %v358 = vsel %vm227, %v297, 0.0
        %v359 = vadd.f32 %v357, %v358
        %v360 = vsel %vm227, %v299, 0.0
        %v361 = vadd.f32 %v359, %v360
        %v362 = vsel %vm227, %v301, 0.0
        %v363 = vadd.f32 %v361, %v362
        %v364 = vsel %vm227, %v303, 0.0
        %v365 = vadd.f32 %v363, %v364
        %v366 = vsel %vm227, %v305, 0.0
        %v367 = vadd.f32 %v365, %v366
        %v368 = vsel %vm227, %v307, 0.0
        %v369 = vadd.f32 %v367, %v368
        %v370 = vsel %vm227, %v309, 0.0
        %v371 = vadd.f32 %v369, %v370
        %v372 = vsel %vm227, %v311, 0.0
        %v373 = vadd.f32 %v371, %v372
        %v374 = vsel %vm227, %v313, 0.0
        %v375 = vadd.f32 %v373, %v374
        %v376 = vsel %vm227, %v315, 0.0
        %v377 = vadd.f32 %v375, %v376
        %v378 = vsel %vm227, %v317, 0.0
        %v379 = vadd.f32 %v377, %v378
        %v380 = vsel %vm227, %v319, 0.0
        %v381 = vadd.f32 %v379, %v380
        %v382 = vsel %vm227, %v321, 0.0
        %v383 = vadd.f32 %v381, %v382
        %v384 = vsel %vm227, %v258, 0.0
        %v385 = vsel %vm227, %v289, 0.0
        %v386 = vadd.f32 %v384, %v385
        %v387 = vrot.slane %v386, 4
        %v388 = vadd.f32 %v386, %v387
        %v389 = vrot.slane %v388, 2
        %v390 = vadd.f32 %v388, %v389
        %v391 = vrot.slane %v390, 1
        %v392 = vadd.f32 %v390, %v391
        %vm393 = vcmask 24576
        %394 = vst.msk [vmem:[%s147] sm:$0x1] %vm393, %v392
        %v395 = vsel %vm227, %v352, 0.0
        %v396 = vsel %vm227, %v383, 0.0
        %v397 = vadd.f32 %v395, %v396
        %v398 = vrot.slane %v397, 4
        %v399 = vadd.f32 %v397, %v398
        %v400 = vrot.slane %v399, 2
        %v401 = vadd.f32 %v399, %v400
        %v402 = vrot.slane %v401, 1
        %v403 = vadd.f32 %v401, %v402
        %404 = vst.msk [vmem:[%s147 + $0x1] sm:$0x1] %vm393, %v403
        %s405 = sand.u32 %s76, 1
        %s406 = scalar_lea.sflag [#allocation3], %s405
        %s407 = sand.u32 %s76, 1
        %s408 = smul.addr %s407, 2
        %s409 = scalar_lea.vmem [#allocation2], %s408
        // Predicated region
        $region29: #{tpu_custom_call.1} parent=27 // pred_check
          %p410 = pneg %p86
        $region30: #{tpu_custom_call.1} parent=27 // pred_check_branch
          %412 = sbr.rel (%p410) target = $region32
        $region31: #{tpu_custom_call.1} parent=27 // pred_region
          %s414 = ssub.s32 32, 32
          %415 = vsyncadd %s406, %s414
          %s416 = smul.addr %s16, 32
          %s417 = scalar_lea.hbm %s2, %s416
          %s419 = sshll.u32 %s409, 4
          %s420 = int_to_ptr.vmem [resolvable:$true] %s419
          %422 = dma.vmem_to_hbm [thread:$0]  %s420, 32, %s417, %s406
        $region32: #{tpu_custom_call.1} parent=27 // pred_fallthru
          _
      $region28: #{tpu_custom_call.1} parent=5 // pred_fallthru
        _
      %p423 = scmp.le.s32.totalorder 2, %s11
      // Predicated region
      $region33: #{tpu_custom_call.1} parent=5 // pred_check
        %p424 = pneg %p423
      $region34: #{tpu_custom_call.1} parent=5 // pred_check_branch
        %426 = sbr.rel (%p424) target = $region36
      $region35: #{tpu_custom_call.1} parent=5 // pred_region
        %s427 = ssub.s32 %s11, 2
        // Predicated region
        $region37: #{tpu_custom_call.1} parent=35 // pred_check
          %p428 = pneg %p92
        $region38: #{tpu_custom_call.1} parent=35 // pred_check_branch
          %430 = sbr.rel (%p428) target = $region40
        $region39: #{tpu_custom_call.1} parent=35 // pred_region
          %s431 = sand.u32 %s77, 1
          %s432 = scalar_lea.sflag [#allocation3], %s431
          %s433 = sand.u32 %s77, 1
          %s434 = smul.addr %s433, 2
          %s435 = scalar_lea.vmem [#allocation2], %s434
          %436 = dma.done %s432, 32
        $region40: #{tpu_custom_call.1} parent=35 // pred_fallthru
          _
      $region36: #{tpu_custom_call.1} parent=5 // pred_fallthru
        _
    $region6: #{tpu_custom_call.1} parent=1 // loop_footer
      %s15 = sadd.s32 1, %s11
    $region7: #{tpu_custom_call.1} parent=1 // loop_footer_branch
      %10 = sbr.rel target = $region3
    $region8: #{tpu_custom_call.1} parent=1 // loop_exit
      _
    %437 = vsyncpa [#allocation3], 1
    %s438 = scalar_lea.sflag [#allocation3], 1
    %439 = vsyncpa %s438, 1

</llo_original>
